<compile_context>
chip_gen: v6e
topology: v6e:2x2x1
jax: 0.10.0
libtpu: 0.0.40
codegen_flags: <defaults>
</compile_context>

<pallas_src>
import jax
import jax.numpy as jnp
from jax.experimental import pallas as pl
from jax.experimental.pallas import tpu as pltpu


def bigram_ce_kernel(idx_sref, tgt_sref, row_ref, logits_ref, nll_ref):
    """One grid step == one flat token position.

    idx_sref  : (N,) int32 SMEM (scalar prefetch) -- token ids (used by index_map)
    tgt_sref  : (N,) int32 SMEM (scalar prefetch) -- target ids
    row_ref   : (1, 1, V) f32 VMEM -- gathered embedding row table[idx[i]]
    logits_ref: (1, 1, V) f32 VMEM -- logits output tile for row i
    nll_ref   : (1, 1, 1) f32 VMEM -- per-row cross-entropy partial
    """
    del idx_sref  # only consumed by the index_map (the gather itself)
    i = pl.program_id(0)

    row = row_ref[...]                                       # (1, 1, V)
    logits_ref[...] = row                                    # logits == embedding row

    # Numerically stable logsumexp over the vocab (lane) axis.
    m = jnp.max(row, axis=-1, keepdims=True)                 # (1, 1, 1)
    lse = m + jnp.log(jnp.sum(jnp.exp(row - m), axis=-1, keepdims=True))

    # Target logit via iota-masked select -- no materialized one-hot temporary.
    tgt = tgt_sref[i]                                        # scalar int32 from SMEM
    col = jax.lax.broadcasted_iota(jnp.int32, row.shape, 2)  # (1, 1, V)
    tgt_logit = jnp.sum(jnp.where(col == tgt, row, 0.0), axis=-1, keepdims=True)

    nll_ref[...] = lse - tgt_logit                           # (1, 1, 1)


def bigram_logits_kernel(idx_sref, row_ref, logits_ref):
    """targets=None path: pure embedding-row gather (logits passthrough)."""
    del idx_sref
    logits_ref[...] = row_ref[...]


def bigram_forward(idx, targets, table):
    """Matches BigramLanguageModel.forward(idx, targets).

    targets given : returns ((B*T, V) logits, scalar mean cross-entropy loss)
    targets=None  : returns ((B, T, V) logits, None)
    """
    B, T = idx.shape
    V = table.shape[0]
    N = B * T

    idx_flat = idx.reshape(N).astype(jnp.int32)
    # Present the table as (V, 1, V): every block is then a full (1, V)
    # lane-dense slab on the last two dims and the row axis is gathered via
    # the data-dependent index_map (scalar-prefetched token ids in SMEM).
    table3 = table.reshape(V, 1, V).astype(jnp.float32)

    cparams = pltpu.CompilerParams(dimension_semantics=("parallel",))

    if targets is None:
        logits3 = pl.pallas_call(
            bigram_logits_kernel,
            out_shape=jax.ShapeDtypeStruct((N, 1, V), jnp.float32),
            grid_spec=pltpu.PrefetchScalarGridSpec(
                num_scalar_prefetch=1,
                grid=(N,),
                in_specs=[pl.BlockSpec((1, 1, V),
                                       lambda i, idx_s: (idx_s[i], 0, 0))],
                out_specs=pl.BlockSpec((1, 1, V), lambda i, idx_s: (i, 0, 0)),
            ),
            compiler_params=cparams,
        )(idx_flat, table3)
        return logits3.reshape(B, T, V), None

    tgt_flat = targets.reshape(N).astype(jnp.int32)
    logits3, nll3 = pl.pallas_call(
        bigram_ce_kernel,
        out_shape=(
            jax.ShapeDtypeStruct((N, 1, V), jnp.float32),
            jax.ShapeDtypeStruct((N, 1, 1), jnp.float32),
        ),
        grid_spec=pltpu.PrefetchScalarGridSpec(
            num_scalar_prefetch=2,
            grid=(N,),
            in_specs=[pl.BlockSpec((1, 1, V),
                                   lambda i, idx_s, tgt_s: (idx_s[i], 0, 0))],
            out_specs=(
                pl.BlockSpec((1, 1, V), lambda i, idx_s, tgt_s: (i, 0, 0)),
                pl.BlockSpec((1, 1, 1), lambda i, idx_s, tgt_s: (i, 0, 0)),
            ),
        ),
        compiler_params=cparams,
    )(idx_flat, tgt_flat, table3)

    logits_flat = logits3.reshape(N, V)
    loss = jnp.mean(nll3)  # mean over B*T rows == F.cross_entropy default reduction
    return logits_flat, loss


if __name__ == "__main__":
    # Small, deterministic setup: vocab_size lane-aligned (128), batch=2, seq=8.
    V = 128
    B, T = 2, 8

    key = jax.random.PRNGKey(0)
    k_table, k_idx, k_tgt = jax.random.split(key, 3)

    # nn.Embedding default init: N(0, 1)
    table = jax.random.normal(k_table, (V, V), dtype=jnp.float32)
    idx = jax.random.randint(k_idx, (B, T), 0, V, dtype=jnp.int32)
    targets = jax.random.randint(k_tgt, (B, T), 0, V, dtype=jnp.int32)

    # Training-style call (targets given).
    logits, loss = bigram_forward(idx, targets, table)
    jax.block_until_ready((logits, loss))

    # Inference-style call (targets=None) -> (B, T, V) logits, loss=None.
    logits_bt, loss_none = bigram_forward(idx, None, table)
    jax.block_until_ready(logits_bt)

    # Pure-JAX reference check (embedding gather + cross-entropy).
    ref_logits = table[idx.reshape(-1)]
    ref_lse = jax.scipy.special.logsumexp(ref_logits, axis=-1)
    ref_tgt = jnp.take_along_axis(
        ref_logits, targets.reshape(-1, 1), axis=-1)[:, 0]
    ref_loss = jnp.mean(ref_lse - ref_tgt)

    assert logits.shape == (B * T, V)
    assert jnp.allclose(logits, ref_logits, atol=1e-5, rtol=1e-5)
    assert jnp.allclose(loss, ref_loss, atol=1e-5, rtol=1e-5)

    assert loss_none is None
    assert logits_bt.shape == (B, T, V)
    assert jnp.allclose(logits_bt, ref_logits.reshape(B, T, V), atol=1e-5, rtol=1e-5)

    print("KERNEL_OK")
</pallas_src>

<mosaic_0001>
module attributes {stable_mosaic.version = 11 : i64} {
  func.func @bigram_ce_kernel(%arg0: i32, %arg1: memref<16xi32, #tpu.memory_space<smem>>, %arg2: memref<16xi32, #tpu.memory_space<smem>>, %arg3: memref<1x1x128xf32, #tpu.memory_space<vmem>>, %arg4: memref<1x1x128xf32, #tpu.memory_space<vmem>>, %arg5: memref<1x1x1xf32, #tpu.memory_space<vmem>>) attributes {dimension_semantics = [#tpu.dimension_semantics<parallel>], iteration_bounds = array<i64: 16>, scalar_prefetch = 2 : i64, scratch_operands = 0 : i64, tpu.core_type = #tpu.core_type<tc>, window_params = [{transform_indices = @transform_0, window_bounds = array<i64: 1, 1, 128>}, {transform_indices = @transform_1, window_bounds = array<i64: 1, 1, 128>}, {transform_indices = @transform_2, window_bounds = array<i64: 1, 1, 1>}]} {
    %c0 = arith.constant 0 : index
    %c0_0 = arith.constant 0 : index
    %c0_1 = arith.constant 0 : index
    %0 = vector.load %arg3[%c0, %c0_0, %c0_1] : memref<1x1x128xf32, #tpu.memory_space<vmem>>, vector<1x1x128xf32>
    %c0_2 = arith.constant 0 : index
    %c0_3 = arith.constant 0 : index
    %c0_4 = arith.constant 0 : index
    %1 = vector.load %arg4[%c0_2, %c0_3, %c0_4] : memref<1x1x128xf32, #tpu.memory_space<vmem>>, vector<1x1x128xf32>
    tpu.vector_store %arg4[%c0_2, %c0_3, %c0_4], %0 {strides = array<i32>} : memref<1x1x128xf32, #tpu.memory_space<vmem>>, vector<1x1x128xf32>,
    %cst = arith.constant dense<0xFF800000> : vector<1x1xf32>
    %2 = vector.multi_reduction <maximumf>, %0, %cst [2] : vector<1x1x128xf32> to vector<1x1xf32>
    %3 = vector.shape_cast %2 : vector<1x1xf32> to vector<1x1x1xf32>
    %4 = vector.broadcast %3 : vector<1x1x1xf32> to vector<1x1x128xf32>
    %5 = arith.subf %0, %4 : vector<1x1x128xf32>
    %6 = math.exp %5 : vector<1x1x128xf32>
    %cst_5 = arith.constant dense<0.000000e+00> : vector<1x1xf32>
    %7 = vector.multi_reduction <add>, %6, %cst_5 [2] : vector<1x1x128xf32> to vector<1x1xf32>
    %8 = vector.shape_cast %7 : vector<1x1xf32> to vector<1x1x1xf32>
    %9 = math.log %8 : vector<1x1x1xf32>
    %10 = arith.addf %3, %9 : vector<1x1x1xf32>
    %11 = arith.index_cast %arg0 : i32 to index
    %12 = memref.load %arg2[%11] : memref<16xi32, #tpu.memory_space<smem>>
    %13 = tpu.iota {dimensions = array<i32: 2>} : vector<1x1x128xi32>
    %14 = vector.broadcast %12 : i32 to vector<1x1x128xi32>
    %15 = arith.cmpi eq, %13, %14 : vector<1x1x128xi32>
    %cst_6 = arith.constant 0.000000e+00 : f32
    %16 = vector.broadcast %cst_6 : f32 to vector<1x1x128xf32>
    %17 = arith.select %15, %0, %16 : vector<1x1x128xi1>, vector<1x1x128xf32>
    %cst_7 = arith.constant dense<0.000000e+00> : vector<1x1xf32>
    %18 = vector.multi_reduction <add>, %17, %cst_7 [2] : vector<1x1x128xf32> to vector<1x1xf32>
    %19 = vector.shape_cast %18 : vector<1x1xf32> to vector<1x1x1xf32>
    %20 = arith.subf %10, %19 : vector<1x1x1xf32>
    %c0_8 = arith.constant 0 : index
    %c0_9 = arith.constant 0 : index
    %c0_10 = arith.constant 0 : index
    %21 = vector.load %arg5[%c0_8, %c0_9, %c0_10] : memref<1x1x1xf32, #tpu.memory_space<vmem>>, vector<1x1x1xf32>
    tpu.vector_store %arg5[%c0_8, %c0_9, %c0_10], %20 {strides = array<i32>} : memref<1x1x1xf32, #tpu.memory_space<vmem>>, vector<1x1x1xf32>,
    return
  }
  func.func @transform_0(%arg0: i32, %arg1: memref<16xi32, #tpu.memory_space<smem>>, %arg2: memref<16xi32, #tpu.memory_space<smem>>) -> (i32, i32, i32) {
    %0 = arith.index_cast %arg0 : i32 to index
    %1 = memref.load %arg1[%0] : memref<16xi32, #tpu.memory_space<smem>>
    %c0_i32 = arith.constant 0 : i32
    %c0_i32_0 = arith.constant 0 : i32
    %c0_i32_1 = arith.constant 0 : i32
    return %1, %c0_i32, %c0_i32_0 : i32, i32, i32
  }
  func.func @transform_1(%arg0: i32, %arg1: memref<16xi32, #tpu.memory_space<smem>>, %arg2: memref<16xi32, #tpu.memory_space<smem>>) -> (i32, i32, i32) {
    %c0_i32 = arith.constant 0 : i32
    %c0_i32_0 = arith.constant 0 : i32
    %c0_i32_1 = arith.constant 0 : i32
    return %arg0, %c0_i32, %c0_i32_0 : i32, i32, i32
  }
  func.func @transform_2(%arg0: i32, %arg1: memref<16xi32, #tpu.memory_space<smem>>, %arg2: memref<16xi32, #tpu.memory_space<smem>>) -> (i32, i32, i32) {
    %c0_i32 = arith.constant 0 : i32
    %c0_i32_0 = arith.constant 0 : i32
    %c0_i32_1 = arith.constant 0 : i32
    return %arg0, %c0_i32, %c0_i32_0 : i32, i32, i32
  }
}

</mosaic_0001>

<llo_original>
// kernel: tpu_custom_call.1
$region0: #{tpu_custom_call.1}
  #allocation0 [shape = 'u32[]', space=smem, size = 0x4, offset = 0x4, fixed_abs, tag = 'smem constant byte address 0x4 - core index']
  #allocation1 [shape = 'u32[144,128]{1,0:T(1,128)}', space=vmem, size = 0x12000, scoped, tag = 'internal scratch']
  #allocation2 [shape = 's32[1]{0}', space=sflag, size = 0x4, scoped, tag = 'scoped memory for tpu_custom_call.1']
  #allocation3 [shape = 'u8[512]{0}', space=smem, size = 0x200, scoped, tag = 'prefetched SMEM operand 0']
  #allocation4 [shape = 'u8[512]{0}', space=smem, size = 0x200, scoped, tag = 'prefetched SMEM operand 1']
  %s0 = inlined_call_operand.hbm [shape: s32[16], index: 0, kind: input, shape index: {}]
  %s1 = inlined_call_operand.vmem [shape: s32[16], index: 1, kind: input, shape index: {}]
  %s2 = inlined_call_operand.hbm [shape: f32[128,1,128], index: 2, kind: input, shape index: {}]
  %s3 = inlined_call_operand.hbm [shape: f32[16,1,128], index: 3, kind: output, shape index: {0}]
  %s4 = inlined_call_operand.vmem [shape: f32[16,1,1], index: 4, kind: output, shape index: {1}]
  %5 = xla_tuple %s3, %s4
  %s6 = sld [smem:[#allocation0]]
  $region49: #{tpu_custom_call.1} parent=0
    _
  %s8 = ssub.s32 1, %s6
  %s9 = scalar_select 0, %s8, %s6
  %11 = dma.hbm_to_smem %s0, 16, [#allocation3], [#allocation2]
  %s12 = sshll.u32 %s1, 4
  %s13 = int_to_ptr.vmem [resolvable:$true] %s12
  %15 = dma.vmem_to_smem %s13, 16, [#allocation4], [#allocation2]
  %16 = dma.done [#allocation2], 32
  %17 = sfence
  $region1: #{tpu_custom_call.1} parent=0
    #allocation5 [shape = 'u8[1024]{0}', space=vmem, size = 0x400, scoped, tag = 'input window, operand 2']
    #allocation6 [shape = 's32[2]{0}', space=sflag, size = 0x8, scoped, tag = 'scoped memory for tpu_custom_call.1']
    #allocation7 [shape = 's32[2]{0}', space=sflag, size = 0x8, scoped, tag = 'scoped memory for tpu_custom_call.1']
    #allocation8 [shape = 'u8[1024]{0}', space=vmem, size = 0x400, scoped, tag = 'output window, operand 0']
    %18 = vsyncpa [#allocation6], 0
    %s19 = scalar_lea.sflag [#allocation6], 1
    %20 = vsyncpa %s19, 0
    %21 = vsyncpa [#allocation7], 0
    %s22 = scalar_lea.sflag [#allocation7], 1
    %23 = vsyncpa %s22, 0
    loop: start=0, step=1, limit=18
    $region2: #{tpu_custom_call.1} parent=1 // loop_pre_header
      _
    $region3: #{tpu_custom_call.1} parent=1 // loop_header
      %s25 = sphi 0, %s29
      %p26 = scmp.ge.s32.totalorder %s25, 18
      %s37 = sphi 0, %s39
      %s40 = sphi 0, %s37
      %s41 = sphi 0, %s40
      %s57 = sphi 0, %s41
      %s63 = sphi 0, %s65
      %s66 = sphi 0, %s63
      %s67 = sphi 0, %s66
      %s83 = sphi 0, %s67
      %s89 = sphi 0, %s91
      %s92 = sphi 0, %s89
      %s93 = sphi 0, %s92
      %s109 = sphi 0, %s93
    $region4: #{tpu_custom_call.1} parent=1 // loop_header_branch
      %28 = sbr.rel (%p26) target = $region8
    $region5: #{tpu_custom_call.1} parent=1 // loop_body
      %s30 = ssub.s32 %s25, 1
      %s31 = ssub.s32 %s25, 2
      %s32 = sadd.s32 %s25, 1
      %s33 = sld [smem:[#allocation3 + %s25]]
      %s34 = sld [smem:[#allocation3 + %s32]]
      %s35 = ssub.s32 %s33, %s34
      %p36 = scmp.eq.s32.totalorder %s35, 0
      %s38 = sadd.s32 %s37, 1
      %s39 = scalar_select %p36, %s37, %s38
      %p42 = pneg %p36
      %p43 = scmp.eq.s32.totalorder %s25, 15
      %p44 = por %p42, %p43
      %p45 = scmp.ne.s32.totalorder %s37, %s40
      %p46 = scmp.eq.s32.totalorder %s25, 0
      %p47 = por %p45, %p46
      %p48 = scmp.ne.s32.totalorder %s37, %s40
      %p49 = scmp.eq.s32.totalorder %s30, 15
      %p50 = por %p48, %p49
      %p51 = scmp.ne.s32.totalorder %s40, %s41
      %p52 = scmp.eq.s32.totalorder %s30, 0
      %p53 = por %p51, %p52
      %p54 = scmp.ne.s32.totalorder %s40, %s41
      %p55 = scmp.eq.s32.totalorder %s31, 15
      %p56 = por %p54, %p55
      %p58 = scmp.ne.s32.totalorder %s41, %s57
      %p59 = scmp.eq.s32.totalorder %s31, 0
      %p60 = por %p58, %p59
      %s61 = ssub.s32 %s25, %s32
      %p62 = scmp.eq.s32.totalorder %s61, 0
      %s64 = sadd.s32 %s63, 1
      %s65 = scalar_select %p62, %s63, %s64
      %p68 = pneg %p62
      %p69 = scmp.eq.s32.totalorder %s25, 15
      %p70 = por %p68, %p69
      %p71 = scmp.ne.s32.totalorder %s63, %s66
      %p72 = scmp.eq.s32.totalorder %s25, 0
      %p73 = por %p71, %p72
      %p74 = scmp.ne.s32.totalorder %s63, %s66
      %p75 = scmp.eq.s32.totalorder %s30, 15
      %p76 = por %p74, %p75
      %p77 = scmp.ne.s32.totalorder %s66, %s67
      %p78 = scmp.eq.s32.totalorder %s30, 0
      %p79 = por %p77, %p78
      %p80 = scmp.ne.s32.totalorder %s66, %s67
      %p81 = scmp.eq.s32.totalorder %s31, 15
      %p82 = por %p80, %p81
      %p84 = scmp.ne.s32.totalorder %s67, %s83
      %p85 = scmp.eq.s32.totalorder %s31, 0
      %p86 = por %p84, %p85
      %s87 = ssub.s32 %s25, %s32
      %p88 = scmp.eq.s32.totalorder %s87, 0
      %s90 = sadd.s32 %s89, 1
      %s91 = scalar_select %p88, %s89, %s90
      %p94 = pneg %p88
      %p95 = scmp.eq.s32.totalorder %s25, 15
      %p96 = por %p94, %p95
      %p97 = scmp.ne.s32.totalorder %s89, %s92
      %p98 = scmp.eq.s32.totalorder %s25, 0
      %p99 = por %p97, %p98
      %p100 = scmp.ne.s32.totalorder %s89, %s92
      %p101 = scmp.eq.s32.totalorder %s30, 15
      %p102 = por %p100, %p101
      %p103 = scmp.ne.s32.totalorder %s92, %s93
      %p104 = scmp.eq.s32.totalorder %s30, 0
      %p105 = por %p103, %p104
      %p106 = scmp.ne.s32.totalorder %s92, %s93
      %p107 = scmp.eq.s32.totalorder %s31, 15
      %p108 = por %p106, %p107
      %p110 = scmp.ne.s32.totalorder %s93, %s109
      %p111 = scmp.eq.s32.totalorder %s31, 0
      %p112 = por %p110, %p111
      %p113 = scmp.le.s32.totalorder 1, %s25
      %p114 = scmp.lt.s32.totalorder %s25, 17
      %p115 = pnand %p113, %p114
      %p116 = pneg %p115
      // Predicated region
      $region9: #{tpu_custom_call.1} parent=5 // pred_check
        _
      $region10: #{tpu_custom_call.1} parent=5 // pred_check_branch
        %118 = sbr.rel (%p115) target = $region12
      $region11: #{tpu_custom_call.1} parent=5 // pred_region
        %s119 = ssub.s32 %s25, 1
      $region12: #{tpu_custom_call.1} parent=5 // pred_fallthru
        _
      %p120 = scmp.lt.s32.totalorder %s25, 16
      // Predicated region
      $region13: #{tpu_custom_call.1} parent=5 // pred_check
        %p121 = pneg %p120
      $region14: #{tpu_custom_call.1} parent=5 // pred_check_branch
        %123 = sbr.rel (%p121) target = $region16
      $region15: #{tpu_custom_call.1} parent=5 // pred_region
        // Predicated region
        $region17: #{tpu_custom_call.1} parent=15 // pred_check
          %p124 = pneg %p47
        $region18: #{tpu_custom_call.1} parent=15 // pred_check_branch
          %126 = sbr.rel (%p124) target = $region20
        $region19: #{tpu_custom_call.1} parent=15 // pred_region
          %s127 = sand.u32 %s37, 1
          %s128 = scalar_lea.sflag [#allocation6], %s127
          %s129 = sand.u32 %s37, 1
          %s130 = scalar_lea.vmem [#allocation5], %s129
          %s131 = sld [smem:[#allocation3 + %s25]]
          %s133 = ssub.s32 16, 16
          %134 = vsyncadd %s128, %s133
          %s135 = smul.addr %s131, 16
          %s136 = scalar_lea.hbm %s2, %s135
          %s138 = sshll.u32 %s130, 4
          %s139 = int_to_ptr.vmem [resolvable:$true] %s138
          %141 = dma.hbm_to_vmem [thread:$0]  %s136, 16, %s139, %s128
        $region20: #{tpu_custom_call.1} parent=15 // pred_fallthru
          _
      $region16: #{tpu_custom_call.1} parent=5 // pred_fallthru
        _
      %p142 = scmp.le.s32.totalorder 1, %s25
      %p143 = scmp.lt.s32.totalorder %s25, 17
      %p144 = pnand %p142, %p143
      %p145 = pneg %p144
      // Predicated region
      $region21: #{tpu_custom_call.1} parent=5 // pred_check
        _
      $region22: #{tpu_custom_call.1} parent=5 // pred_check_branch
        %147 = sbr.rel (%p144) target = $region24
      $region23: #{tpu_custom_call.1} parent=5 // pred_region
        %s148 = ssub.s32 %s25, 1
        %s149 = sand.u32 %s40, 1
        %s150 = scalar_lea.sflag [#allocation6], %s149
        %s151 = sand.u32 %s40, 1
        %s152 = scalar_lea.vmem [#allocation5], %s151
        // Predicated region
        $region25: #{tpu_custom_call.1} parent=23 // pred_check
          %p153 = pneg %p53
        $region26: #{tpu_custom_call.1} parent=23 // pred_check_branch
          %155 = sbr.rel (%p153) target = $region28
        $region27: #{tpu_custom_call.1} parent=23 // pred_region
          %156 = dma.done %s150, 16
        $region28: #{tpu_custom_call.1} parent=23 // pred_fallthru
          _
        %s157 = sand.u32 %s40, 1
        %s158 = scalar_lea.sflag [#allocation6], %s157
        %s159 = sand.u32 %s40, 1
        %s160 = scalar_lea.vmem [#allocation5], %s159
        %p161 = pneg %p53
        %p162 = pneg %p50
        %p163 = pneg %p79
        %p164 = pneg %p76
        %s165 = sand.u32 %s66, 1
        %s166 = scalar_lea.sflag [#allocation7], %s165
        %s167 = sand.u32 %s66, 1
        %s168 = scalar_lea.vmem [#allocation8], %s167
        %p169 = pneg %p105
        %p170 = pneg %p102
        %p171 = scmp.lt.s32.totalorder %s30, 15
        %s172 = scalar_select %p171, %s30, 15
        %s173 = scalar_lea.vmem %s4, %s172
        %s174 = sld [smem:[#allocation3 + %s30]]
        %p175 = scmp.lt.s32.totalorder %s30, 15
        %s176 = scalar_select %p175, %s30, 15
        %s177 = scalar_lea.vmem %s4, %s176
        %v178 = vld [vmem:[%s152] sm:$0x1]
        %179 = vst [vmem:[%s168] sm:$0x1] %v178
        %vm180 = vcmask 1040384
        %v181 = vsel %vm180, %v178, -inf
        %182 = vmax.xlane.f32.xlu0 %v181
        %v183 = vpop.xlane.xlu0 %182
        %v184 = vsub.f32 %v178, %v183
        %v185 = vmul.f32 %v184, 1.442695
        %v186 = vpow.pop %v185
        %v187 = vsel %vm180, %v186, 0.0
        %188 = vadd.xlane.f32.xlu0 %v187
        %v189 = vpop.xlane.xlu0 %188
        %v190 = vlog2.pop %v189
        %v191 = vmul.f32 %v190, 0.6931472
        %v192 = vadd.f32 %v183, %v191
        %s193 = sld [smem:[#allocation4 + %s30]]
        %v194 = vlaneseq
        %v195 = vand.u32 %v194, 127
        %v196 = vstv %s193
        %vm197 = vcmp.eq.s32.totalorder %v195, %v196
        %v198 = vsel %vm197, %v178, 0.0
        %v199 = vsel %vm180, %v198, 0.0
        %200 = vadd.xlane.f32.xlu0 %v199
        %v201 = vpop.xlane.xlu0 %200
        %v202 = vsub.f32 %v192, %v201
        %vm203 = vcmask 0
        %204 = vst.msk [vmem:[%s177] sm:$0x1] %vm203, %v202
        %s205 = sand.u32 %s66, 1
        %s206 = scalar_lea.sflag [#allocation7], %s205
        %s207 = sand.u32 %s66, 1
        %s208 = scalar_lea.vmem [#allocation8], %s207
        %p209 = scmp.lt.s32.totalorder %s30, 15
        %s210 = scalar_select %p209, %s30, 15
        %s211 = scalar_lea.vmem %s4, %s210
        // Predicated region
        $region29: #{tpu_custom_call.1} parent=23 // pred_check
          %p212 = pneg %p76
        $region30: #{tpu_custom_call.1} parent=23 // pred_check_branch
          %214 = sbr.rel (%p212) target = $region32
        $region31: #{tpu_custom_call.1} parent=23 // pred_region
          %s216 = ssub.s32 16, 16
          %217 = vsyncadd %s206, %s216
          %s218 = smul.addr %s30, 16
          %s219 = scalar_lea.hbm %s3, %s218
          %s221 = sshll.u32 %s208, 4
          %s222 = int_to_ptr.vmem [resolvable:$true] %s221
          %224 = dma.vmem_to_hbm [thread:$0]  %s222, 16, %s219, %s206
        $region32: #{tpu_custom_call.1} parent=23 // pred_fallthru
          _
        // Predicated region
        $region33: #{tpu_custom_call.1} parent=23 // pred_check
          %p225 = pneg %p102
        $region34: #{tpu_custom_call.1} parent=23 // pred_check_branch
          %227 = sbr.rel (%p225) target = $region36
        $region35: #{tpu_custom_call.1} parent=23 // pred_region
          _
        $region36: #{tpu_custom_call.1} parent=23 // pred_fallthru
          _
      $region24: #{tpu_custom_call.1} parent=5 // pred_fallthru
        _
      %p228 = scmp.le.s32.totalorder 2, %s25
      // Predicated region
      $region37: #{tpu_custom_call.1} parent=5 // pred_check
        %p229 = pneg %p228
      $region38: #{tpu_custom_call.1} parent=5 // pred_check_branch
        %231 = sbr.rel (%p229) target = $region40
      $region39: #{tpu_custom_call.1} parent=5 // pred_region
        %s232 = ssub.s32 %s25, 2
        // Predicated region
        $region41: #{tpu_custom_call.1} parent=39 // pred_check
          %p233 = pneg %p82
        $region42: #{tpu_custom_call.1} parent=39 // pred_check_branch
          %235 = sbr.rel (%p233) target = $region44
        $region43: #{tpu_custom_call.1} parent=39 // pred_region
          %s236 = sand.u32 %s67, 1
          %s237 = scalar_lea.sflag [#allocation7], %s236
          %s238 = sand.u32 %s67, 1
          %s239 = scalar_lea.vmem [#allocation8], %s238
          %240 = dma.done %s237, 16
        $region44: #{tpu_custom_call.1} parent=39 // pred_fallthru
          _
        // Predicated region
        $region45: #{tpu_custom_call.1} parent=39 // pred_check
          %p241 = pneg %p108
        $region46: #{tpu_custom_call.1} parent=39 // pred_check_branch
          %243 = sbr.rel (%p241) target = $region48
        $region47: #{tpu_custom_call.1} parent=39 // pred_region
          %p244 = scmp.lt.s32.totalorder %s31, 15
          %s245 = scalar_select %p244, %s31, 15
          %s246 = scalar_lea.vmem %s4, %s245
        $region48: #{tpu_custom_call.1} parent=39 // pred_fallthru
          _
      $region40: #{tpu_custom_call.1} parent=5 // pred_fallthru
        _
    $region6: #{tpu_custom_call.1} parent=1 // loop_footer
      %s29 = sadd.s32 1, %s25
    $region7: #{tpu_custom_call.1} parent=1 // loop_footer_branch
      %24 = sbr.rel target = $region3
    $region8: #{tpu_custom_call.1} parent=1 // loop_exit
      _
    %247 = vsyncpa [#allocation6], 1
    %s248 = scalar_lea.sflag [#allocation6], 1
    %249 = vsyncpa %s248, 1
    %250 = vsyncpa [#allocation7], 1
    %s251 = scalar_lea.sflag [#allocation7], 1
    %252 = vsyncpa %s251, 1

</llo_original>
